<compile_context>
chip_gen: v6e
topology: v6e:2x2x1
jax: 0.10.0
libtpu: 0.0.40
codegen_flags: <defaults>
</compile_context>

<pallas_src>
import functools

import jax
import jax.numpy as jnp
from jax import lax
from jax.experimental import pallas as pl
from jax.experimental.pallas import tpu as pltpu

VEHICLE_WEIGHT = 1.5
VEHICLE_CLASS_LO = 0
VEHICLE_CLASS_HI = 3                        # vehicle_classes = [0, 1, 2, 3]

_LANE_CANDIDATES = (1024, 512, 256, 128)    # lane-dense widths (multiples of 128)
_NUM_CORE_SHARDS = 2                        # leading "parallel" axis (v7x megacore)
_TILE_BYTES_TARGET = 2 * 1024 * 1024        # ~2 MiB tile -> ~4 MiB double-buffered
_MAX_TILE_ROWS = 1024                       # bounds unrolled group count / vregs


def _base_loss_kernel(preds_ref, out_ref, *, tm, lane, rows, n_tiles, tpc,
                      need_mask, has_pad):
    """Streams (tm, lane) row tiles; folds sum|p|, sum p^2, sum p into a
    resident (24, lane) f32 output block (rows 0:8 -> |p|, 8:16 -> p^2,
    16:24 -> p).  One output block per core shard.  Cross-lane reduce, means
    and the vehicle penalty are done in the wrapper."""
    c = pl.program_id(0)                     # core shard ("parallel")
    t = pl.program_id(1)                     # tile within shard ("arbitrary")
    g = c * tpc + t                          # global tile index

    @pl.when(t == 0)
    def _init():
        out_ref[...] = jnp.zeros_like(out_ref)

    gsz = 8 if tm >= 8 else tm               # rows per sublane group
    ngroups = (tm // 8) if tm >= 8 else 1

    def _plain_group(k):
        return preds_ref[k * gsz:(k + 1) * gsz, :].astype(jnp.float32)

    def _masked_group(k):
        # Covers both the ragged last data tile and fully-padded tiles
        # (padded tiles have g*tm >= rows, so every row is masked to 0).
        pk = _plain_group(k)
        rid = g * tm + k * gsz + lax.broadcasted_iota(jnp.int32, (gsz, 1), 0)
        return jnp.where(rid < rows, pk, 0.0)

    def _accumulate(load_group):
        # Local vreg accumulators; single read-modify-write of out_ref per tile.
        p0 = load_group(0)
        a_abs = jnp.abs(p0)
        a_sq = p0 * p0
        a_sum = p0
        for k in range(1, ngroups):          # unrolled: pure vreg adds
            pk = load_group(k)
            a_abs = a_abs + jnp.abs(pk)
            a_sq = a_sq + pk * pk
            a_sum = a_sum + pk
        out_ref[0:gsz, :] += a_abs
        out_ref[8:8 + gsz, :] += a_sq
        out_ref[16:16 + gsz, :] += a_sum

    if not (need_mask or has_pad):
        _accumulate(_plain_group)            # hot path: no masking anywhere
    else:
        fast_upto = n_tiles - 1 if need_mask else n_tiles

        @pl.when(g < fast_upto)
        def _fast():
            _accumulate(_plain_group)

        @pl.when(g >= fast_upto)
        def _slow():
            _accumulate(_masked_group)


def _choose_lane(padded_total):
    """Largest lane width dividing padded_total; prefer one giving rows % 8 == 0."""
    best = None
    for lane in _LANE_CANDIDATES:
        if padded_total % lane == 0:
            if best is None:
                best = lane
            if (padded_total // lane) % 8 == 0:
                return lane
    return best                               # >= 128 always divides padded_total


def vehicle_specific_loss(predictions, targets, vehicle_weight=VEHICLE_WEIGHT):
    """Returns (total_loss scalar f32, loss_items (3,) f32)."""
    total_elems = int(predictions.size)
    itemsize = jnp.dtype(predictions.dtype).itemsize

    # ---- lane-dense slab (free reshape; pad only in the rare non-%128 case) ----
    flat = predictions.reshape(-1)
    padded_total = total_elems
    if padded_total % 128 != 0:
        padded_total = ((total_elems + 127) // 128) * 128
        flat = jnp.pad(flat, (0, padded_total - total_elems))   # zeros add nothing
    lane = _choose_lane(padded_total)
    rows = padded_total // lane
    preds2d = flat.reshape(rows, lane)

    # ---- tiling ----
    row_bytes = lane * itemsize
    cap = (_TILE_BYTES_TARGET // max(row_bytes, 1)) // 8 * 8
    cap = max(8, min(cap, _MAX_TILE_ROWS))
    tm = min(cap, (rows // 8) * 8) if rows >= 8 else rows
    n_tiles = pl.cdiv(rows, tm)
    nc = _NUM_CORE_SHARDS if n_tiles >= 2 else 1
    tpc = pl.cdiv(n_tiles, nc)
    need_mask = (n_tiles * tm != rows)        # ragged last data tile
    has_pad = (nc * tpc != n_tiles)           # odd tile count -> one dummy tile

    if has_pad:
        def in_index(c, t):
            return (jnp.minimum(c * tpc + t, n_tiles - 1), 0)   # clamp dummy tile
    else:
        def in_index(c, t):
            return (c * tpc + t, 0)

    tile_bytes = tm * lane * itemsize
    out_block_bytes = 24 * lane * 4
    vmem_limit = int(2 * tile_bytes + 2 * out_block_bytes + (4 << 20))

    kernel = functools.partial(
        _base_loss_kernel, tm=tm, lane=lane, rows=rows, n_tiles=n_tiles,
        tpc=tpc, need_mask=need_mask, has_pad=has_pad)

    cost = pl.CostEstimate(
        flops=5 * rows * lane,
        transcendentals=0,
        bytes_accessed=rows * lane * itemsize + nc * 24 * lane * 4,
    )

    partials = pl.pallas_call(
        kernel,
        out_shape=jax.ShapeDtypeStruct((nc * 24, lane), jnp.float32),
        grid_spec=pltpu.PrefetchScalarGridSpec(
            num_scalar_prefetch=0,
            grid=(nc, tpc),
            in_specs=[pl.BlockSpec((tm, lane), in_index)],
            out_specs=pl.BlockSpec((24, lane), lambda c, t: (c, 0)),
        ),
        compiler_params=pltpu.CompilerParams(
            dimension_semantics=("parallel", "arbitrary"),
            vmem_limit_bytes=vmem_limit),
        cost_estimate=cost,
    )(preds2d)

    # ---- tiny wrapper-side combine (per-core partials -> losses) ----
    sums = partials.reshape(nc, 3, 8, lane).sum(axis=(0, 2, 3))   # [Σ|p|, Σp², Σp]
    inv_n = jnp.float32(1.0 / float(total_elems))                 # true element count
    box = sums[0] * inv_n
    obj = sums[1] * inv_n
    cls_l = jnp.float32(0.5) * (sums[2] + sums[0]) * inv_n        # relu via identity
    base_total = box + obj + cls_l
    items = jnp.stack([box, obj, cls_l])

    # ---- vehicle penalty: tiny XLA op over targets (runs alongside the kernel) ----
    if targets.shape[0] > 0:
        cls_id = targets[:, 1].astype(jnp.int32)                  # .long() truncation
        vmask = (cls_id >= VEHICLE_CLASS_LO) & (cls_id <= VEHICLE_CLASS_HI)
        mask_f = vmask.astype(jnp.float32)
        penalty = jnp.where(mask_f.sum() > 0,
                            jnp.float32(vehicle_weight) * mask_f.mean(),
                            jnp.float32(0.0))
        total = base_total * (jnp.float32(1.0) + penalty)
    else:
        total = base_total
    return total, items


def _reference(predictions, targets, vehicle_weight=VEHICLE_WEIGHT):
    p = predictions.astype(jnp.float32)
    box = jnp.mean(jnp.abs(p))
    obj = jnp.mean(p * p)
    cls_l = jnp.mean(jnp.maximum(p, 0.0))
    total = box + obj + cls_l
    items = jnp.stack([box, obj, cls_l])
    if targets.shape[0] > 0:
        cls_id = targets[:, 1].astype(jnp.int32)
        mask = (cls_id >= 0) & (cls_id <= 3)
        mask_f = mask.astype(jnp.float32)
        penalty = jnp.where(mask_f.sum() > 0, vehicle_weight * mask_f.mean(), 0.0)
        total = total * (1.0 + penalty)
    return total, items


def _make_targets(key, n, cls_lo, cls_hi):
    if n == 0:
        return jnp.zeros((0, 6), dtype=jnp.float32)
    k_img, k_cls, k_box = jax.random.split(key, 3)
    img_idx = jax.random.randint(k_img, (n, 1), 0, 2).astype(jnp.float32)
    cls_col = jax.random.randint(k_cls, (n, 1), cls_lo, cls_hi).astype(jnp.float32)
    boxes = jax.random.uniform(k_box, (n, 4), dtype=jnp.float32)
    return jnp.concatenate([img_idx, cls_col, boxes], axis=1)


def _check(predictions, targets, rtol=5e-5, atol=1e-6):
    total, items = vehicle_specific_loss(predictions, targets)
    total = jax.block_until_ready(total)
    items = jax.block_until_ready(items)
    ref_total, ref_items = _reference(predictions, targets)
    assert jnp.allclose(total, ref_total, rtol=rtol, atol=atol), (total, ref_total)
    assert jnp.allclose(items, ref_items, rtol=rtol, atol=atol), (items, ref_items)


if __name__ == "__main__":
    key = jax.random.PRNGKey(0)
    k1, k2, k3, k4, kt1, kt2, kt4 = jax.random.split(key, 7)

    # 1) main case: NCHW (2, 4, 16, 16) f32, mixed vehicle / non-vehicle targets
    preds1 = jax.random.normal(k1, (2, 4, 16, 16), dtype=jnp.float32)
    tgts1 = _make_targets(kt1, 8, 0, 8)
    _check(preds1, tgts1)

    # 2) non-%128 spatial (pads the slab) + ragged last tile; no vehicle classes
    preds2 = jax.random.normal(k2, (3, 5, 20, 20), dtype=jnp.float32)
    tgts2 = _make_targets(kt2, 6, 4, 10)
    _check(preds2, tgts2)

    # 3) bf16 predictions streamed in native dtype; empty targets
    preds3 = jax.random.normal(k3, (2, 8, 16, 16), dtype=jnp.bfloat16)
    tgts3 = jnp.zeros((0, 6), dtype=jnp.float32)
    _check(preds3, tgts3)

    # 4) larger tensor: odd tile count -> clamped dummy tile on the 2nd core shard
    preds4 = jax.random.normal(k4, (3, 8, 256, 256), dtype=jnp.float32)
    tgts4 = _make_targets(kt4, 16, 0, 12)
    _check(preds4, tgts4)

    print("KERNEL_OK")
</pallas_src>

<mosaic_0001>
module attributes {stable_mosaic.version = 11 : i64} {
  func.func @_base_loss_kernel(%arg0: i32, %arg1: i32, %arg2: memref<8x256xf32, #tpu.memory_space<vmem>>, %arg3: memref<24x256xf32, #tpu.memory_space<vmem>>) attributes {dimension_semantics = [#tpu.dimension_semantics<parallel>, #tpu.dimension_semantics<arbitrary>], iteration_bounds = array<i64: 1, 1>, scalar_prefetch = 0 : i64, scratch_operands = 0 : i64, tpu.core_type = #tpu.core_type<tc>, window_params = [{transform_indices = @transform_0, window_bounds = array<i64: 8, 256>}, {transform_indices = @transform_1, window_bounds = array<i64: 24, 256>}]} {
    %c0_i32 = arith.constant 0 : i32
    %0 = arith.cmpi eq, %arg1, %c0_i32 : i32
    %1 = arith.extui %0 : i1 to i32
    %c0_i32_0 = arith.constant 0 : i32
    %2 = arith.cmpi ne, %1, %c0_i32_0 : i32
    scf.if %2 {
      %cst = arith.constant 0.000000e+00 : f32
      %15 = vector.broadcast %cst : f32 to vector<24x256xf32>
      %c0_12 = arith.constant 0 : index
      %c0_13 = arith.constant 0 : index
      %16 = vector.load %arg3[%c0_12, %c0_13] : memref<24x256xf32, #tpu.memory_space<vmem>>, vector<24x256xf32>
      tpu.vector_store %arg3[%c0_12, %c0_13], %15 {strides = array<i32>} : memref<24x256xf32, #tpu.memory_space<vmem>>, vector<24x256xf32>,
    } else {
    }
    %c0 = arith.constant 0 : index
    %c0_1 = arith.constant 0 : index
    %3 = vector.load %arg2[%c0, %c0_1] : memref<8x256xf32, #tpu.memory_space<vmem>>, vector<8x256xf32>
    %4 = math.absf %3 : vector<8x256xf32>
    %5 = arith.mulf %3, %3 : vector<8x256xf32>
    %c0_2 = arith.constant 0 : index
    %c0_3 = arith.constant 0 : index
    %6 = vector.load %arg3[%c0_2, %c0_3] : memref<24x256xf32, #tpu.memory_space<vmem>>, vector<8x256xf32>
    %7 = arith.addf %6, %4 : vector<8x256xf32>
    %c0_4 = arith.constant 0 : index
    %c0_5 = arith.constant 0 : index
    %8 = vector.load %arg3[%c0_4, %c0_5] : memref<24x256xf32, #tpu.memory_space<vmem>>, vector<8x256xf32>
    tpu.vector_store %arg3[%c0_4, %c0_5], %7 {strides = array<i32>} : memref<24x256xf32, #tpu.memory_space<vmem>>, vector<8x256xf32>,
    %c8 = arith.constant 8 : index
    %c0_6 = arith.constant 0 : index
    %9 = vector.load %arg3[%c8, %c0_6] : memref<24x256xf32, #tpu.memory_space<vmem>>, vector<8x256xf32>
    %10 = arith.addf %9, %5 : vector<8x256xf32>
    %c8_7 = arith.constant 8 : index
    %c0_8 = arith.constant 0 : index
    %11 = vector.load %arg3[%c8_7, %c0_8] : memref<24x256xf32, #tpu.memory_space<vmem>>, vector<8x256xf32>
    tpu.vector_store %arg3[%c8_7, %c0_8], %10 {strides = array<i32>} : memref<24x256xf32, #tpu.memory_space<vmem>>, vector<8x256xf32>,
    %c16 = arith.constant 16 : index
    %c0_9 = arith.constant 0 : index
    %12 = vector.load %arg3[%c16, %c0_9] : memref<24x256xf32, #tpu.memory_space<vmem>>, vector<8x256xf32>
    %13 = arith.addf %12, %3 : vector<8x256xf32>
    %c16_10 = arith.constant 16 : index
    %c0_11 = arith.constant 0 : index
    %14 = vector.load %arg3[%c16_10, %c0_11] : memref<24x256xf32, #tpu.memory_space<vmem>>, vector<8x256xf32>
    tpu.vector_store %arg3[%c16_10, %c0_11], %13 {strides = array<i32>} : memref<24x256xf32, #tpu.memory_space<vmem>>, vector<8x256xf32>,
    return
  }
  func.func @transform_0(%arg0: i32, %arg1: i32) -> (i32, i32) {
    %c1_i32 = arith.constant 1 : i32
    %0 = arith.muli %arg0, %c1_i32 : i32
    %1 = arith.addi %0, %arg1 : i32
    %c0_i32 = arith.constant 0 : i32
    %c0_i32_0 = arith.constant 0 : i32
    return %1, %c0_i32 : i32, i32
  }
  func.func @transform_1(%arg0: i32, %arg1: i32) -> (i32, i32) {
    %c0_i32 = arith.constant 0 : i32
    %c0_i32_0 = arith.constant 0 : i32
    return %arg0, %c0_i32 : i32, i32
  }
}

</mosaic_0001>

<llo_original>
// kernel: tpu_custom_call.1
$region0: #{tpu_custom_call.1}
  #allocation0 [shape = 'u32[]', space=smem, size = 0x4, offset = 0x4, fixed_abs, tag = 'smem constant byte address 0x4 - core index']
  #allocation1 [shape = 'u32[144,128]{1,0:T(1,128)}', space=vmem, size = 0x12000, scoped, tag = 'internal scratch']
  %s0 = inlined_call_operand.hbm [shape: f32[8,256], index: 0, kind: input, shape index: {}]
  %s1 = inlined_call_operand.hbm [shape: f32[24,256], index: 1, kind: output, shape index: {}]
  %s2 = sld [smem:[#allocation0]]
  $region22: #{tpu_custom_call.1} parent=0
    _
  %s4 = ssub.s32 1, %s2
  %s5 = scalar_select 0, %s4, %s2
  $region1: #{tpu_custom_call.1} parent=0
    #allocation2 [shape = 'u8[8192]{0}', space=vmem, size = 0x2000, scoped, tag = 'input window, operand 0, single buffered']
    #allocation3 [shape = 's32[1]{0}', space=sflag, size = 0x4, scoped, tag = 'scoped memory for tpu_custom_call.1']
    #allocation4 [shape = 's32[1]{0}', space=sflag, size = 0x4, scoped, tag = 'scoped memory for tpu_custom_call.1']
    #allocation5 [shape = 'u8[24576]{0}', space=vmem, size = 0x6000, scoped, tag = 'output window, operand 0, single buffered']
    %6 = vsyncpa [#allocation3], 0
    %7 = vsyncpa [#allocation4], 0
    // Predicated region
    $region2: #{tpu_custom_call.1} parent=1 // pred_check
      _
    $region3: #{tpu_custom_call.1} parent=1 // pred_check_branch
      %9 = sbr.rel (0) target = $region5
    $region4: #{tpu_custom_call.1} parent=1 // pred_region
      %s10 = sadd.s32 0, 0
      %s12 = ssub.s32 256, 256
      %13 = vsyncadd [#allocation3], %s12
      %s14 = smul.addr %s10, 2
      %s15 = smul.addr %s14, 128
      %s16 = scalar_lea.hbm %s0, %s15
      %s18 = sshll.u32 [#allocation2], 4
      %s19 = int_to_ptr.vmem [resolvable:$true] %s18
      %21 = dma.hbm_to_vmem [thread:$0]  %s16, 256, %s19, [#allocation3]
    $region5: #{tpu_custom_call.1} parent=1 // pred_fallthru
      _
    // Predicated region
    $region6: #{tpu_custom_call.1} parent=1 // pred_check
      _
    $region7: #{tpu_custom_call.1} parent=1 // pred_check_branch
      %23 = sbr.rel (0) target = $region9
    $region8: #{tpu_custom_call.1} parent=1 // pred_region
      %24 = dma.done [#allocation3], 256
    $region9: #{tpu_custom_call.1} parent=1 // pred_fallthru
      _
    %s25 = sadd.s32 0, 0
    %p26 = scmp.eq.s32.totalorder 0, 0
    // Predicated region
    $region10: #{tpu_custom_call.1} parent=1 // pred_check
      %p27 = pneg %p26
    $region11: #{tpu_custom_call.1} parent=1 // pred_check_branch
      %29 = sbr.rel (%p27) target = $region13
    $region12: #{tpu_custom_call.1} parent=1 // pred_region
      %30 = vst [vmem:[#allocation5] sm:$0xff] 0.0
      %31 = vst [vmem:[#allocation5 + $0x8] sm:$0xff] 0.0
      %32 = vst [vmem:[#allocation5 + $0x10] sm:$0xff] 0.0
      %33 = vst [vmem:[#allocation5 + $0x18] sm:$0xff] 0.0
      %34 = vst [vmem:[#allocation5 + $0x20] sm:$0xff] 0.0
      %35 = vst [vmem:[#allocation5 + $0x28] sm:$0xff] 0.0
    $region13: #{tpu_custom_call.1} parent=1 // pred_fallthru
      _
    %v36 = vld [vmem:[#allocation2] sm:$0xff]
    %v37 = vld [vmem:[#allocation2 + $0x8] sm:$0xff]
    %v38 = vand.u32 2147483647, %v36
    %v39 = vand.u32 2147483647, %v37
    %v40 = vmul.f32 %v36, %v36
    %v41 = vmul.f32 %v37, %v37
    %v42 = vld [vmem:[#allocation5] sm:$0xff]
    %v43 = vld [vmem:[#allocation5 + $0x8] sm:$0xff]
    %v44 = vadd.f32 %v42, %v38
    %v45 = vadd.f32 %v43, %v39
    %46 = vst [vmem:[#allocation5] sm:$0xff] %v44
    %47 = vst [vmem:[#allocation5 + $0x8] sm:$0xff] %v45
    %v48 = vld [vmem:[#allocation5 + $0x10] sm:$0xff]
    %v49 = vld [vmem:[#allocation5 + $0x18] sm:$0xff]
    %v50 = vadd.f32 %v48, %v40
    %v51 = vadd.f32 %v49, %v41
    %52 = vst [vmem:[#allocation5 + $0x10] sm:$0xff] %v50
    %53 = vst [vmem:[#allocation5 + $0x18] sm:$0xff] %v51
    %v54 = vld [vmem:[#allocation5 + $0x20] sm:$0xff]
    %v55 = vld [vmem:[#allocation5 + $0x28] sm:$0xff]
    %v56 = vadd.f32 %v54, %v36
    %v57 = vadd.f32 %v55, %v37
    %58 = vst [vmem:[#allocation5 + $0x20] sm:$0xff] %v56
    %59 = vst [vmem:[#allocation5 + $0x28] sm:$0xff] %v57
    // Predicated region
    $region14: #{tpu_custom_call.1} parent=1 // pred_check
      _
    $region15: #{tpu_custom_call.1} parent=1 // pred_check_branch
      %61 = sbr.rel (0) target = $region17
    $region16: #{tpu_custom_call.1} parent=1 // pred_region
      %s63 = ssub.s32 768, 768
      %64 = vsyncadd [#allocation4], %s63
      %s65 = sshll.u32 [#allocation5], 4
      %s66 = int_to_ptr.vmem [resolvable:$true] %s65
      %71 = dma.vmem_to_hbm [thread:$0]  %s66, 768, %s1, [#allocation4], 256, 256, 16
    $region17: #{tpu_custom_call.1} parent=1 // pred_fallthru
      _
    // Predicated region
    $region18: #{tpu_custom_call.1} parent=1 // pred_check
      _
    $region19: #{tpu_custom_call.1} parent=1 // pred_check_branch
      %73 = sbr.rel (0) target = $region21
    $region20: #{tpu_custom_call.1} parent=1 // pred_region
      %74 = dma.done [#allocation4], 768
    $region21: #{tpu_custom_call.1} parent=1 // pred_fallthru
      _
    %75 = vsyncpa [#allocation3], 1
    %76 = vsyncpa [#allocation4], 1

</llo_original>
